<compile_context>
chip_gen: v7x
topology: tpu7x:2x2x1
jax: 0.10.0
libtpu: 0.0.40
codegen_flags: <defaults>
</compile_context>

<pallas_src>
import jax
import jax.numpy as jnp
from jax import lax
from jax.experimental import pallas as pl
from jax.experimental.pallas import tpu as pltpu


# --------------------------------------------------------------------------- #
# Kernel
# --------------------------------------------------------------------------- #
def bottleneck_kernel(x_ref, w1b_ref, b1_ref, w2b_ref, b2_ref, out_ref,
                      xpad_ref, h1pad_ref):
    """One batch element per grid step, everything in a lane-dense 2D layout.

    x_ref    : (1, H, W*Cin)        f32  input image (unpadded)
    w1b_ref  : (3, W*Cin, W*Cmid)   cdt  banded conv1 weights (one slab per kh)
    b1_ref   : (1, W*Cmid)          f32  conv1 bias tiled over W
    w2b_ref  : (3, W*Cmid, W*Cout)  cdt  banded conv2 weights
    b2_ref   : (1, W*Cout)          f32  conv2 bias tiled over W
    out_ref  : (1, H, W*Cout)       f32  output (lane-dense store)
    xpad_ref : (H+2, W*Cin)         cdt  VMEM staging, H-halo rows zero
    h1pad_ref: (H+2, W*Cmid)        cdt  VMEM staging for the intermediate
    """
    H = x_ref.shape[1]
    wc_in = x_ref.shape[2]
    wc_mid = w1b_ref.shape[2]
    wc_out = w2b_ref.shape[2]
    cdt = xpad_ref.dtype

    x2d = x_ref[0]                                      # (H, W*Cin), f32

    # --- stage the row-padded input (ZeroPad2d folded into the kernel).
    # Only the two halo rows are zeroed; doing it every step costs ~2 stores
    # and stays correct when the "parallel" grid axis is split across cores.
    xpad_ref[0:1, :] = jnp.zeros((1, wc_in), cdt)
    xpad_ref[H + 1:H + 2, :] = jnp.zeros((1, wc_in), cdt)
    xpad_ref[1:H + 1, :] = x2d.astype(cdt)

    # --- conv1: 3 row-band MXU matmuls (K = W*Cin), f32 accumulation.
    acc1 = jnp.zeros((H, wc_mid), jnp.float32)
    for kh in range(3):
        acc1 += jnp.dot(xpad_ref[kh:kh + H, :], w1b_ref[kh],
                        preferred_element_type=jnp.float32)
    h1 = jnp.tanh(acc1 + b1_ref[...])                   # (H, W*Cmid), dense

    # --- stage the row-padded intermediate for conv2 (halo rows only).
    h1pad_ref[0:1, :] = jnp.zeros((1, wc_mid), cdt)
    h1pad_ref[H + 1:H + 2, :] = jnp.zeros((1, wc_mid), cdt)
    h1pad_ref[1:H + 1, :] = h1.astype(cdt)

    # --- conv2: 3 row-band MXU matmuls (K = W*Cmid), f32 accumulation.
    acc2 = jnp.zeros((H, wc_out), jnp.float32)
    for kh in range(3):
        acc2 += jnp.dot(h1pad_ref[kh:kh + H, :], w2b_ref[kh],
                        preferred_element_type=jnp.float32)

    # residual add (exact f32 x) + final tanh, lane-dense store.
    out = jnp.tanh(acc2 + b2_ref[...] + x2d)
    out_ref[0] = out.astype(out_ref.dtype)


# --------------------------------------------------------------------------- #
# Wrapper-side weight preprocessing
# --------------------------------------------------------------------------- #
def _banded_conv_weights(w_hwio, W):
    """Turn (3,3,Ci,Co) conv weights into 3 banded matrices (W*Ci, W*Co).

    band[kh, j*Ci+ci, w*Co+co] = w[kh, kw, ci, co] with kw = j - w + 1,
    zero outside 0 <= kw <= 2.  This folds the 3 W-direction taps *and* the
    W-direction zero padding into a single matmul contraction per kh row band.
    """
    kh, kw, Ci, Co = w_hwio.shape
    assert kh == 3 and kw == 3
    j = jnp.arange(W)[:, None, None]                    # input column index
    w = jnp.arange(W)[None, :, None]                    # output column index
    k = jnp.arange(3)[None, None, :]                    # kw tap
    sel = (j == w + k - 1).astype(w_hwio.dtype)         # (W, W, 3)
    band = jnp.einsum('jwk,hkcm->hjcwm', sel, w_hwio)   # (3, W, Ci, W, Co)
    return band.reshape(3, W * Ci, W * Co)


def bottleneck_block(x_nchw, w1, b1, w2, b2, *, compute_dtype=jnp.bfloat16):
    """x_nchw: (N, Cin, H, W) f32.  w1: (3,3,Cin,2*Cout), w2: (3,3,2*Cout,Cout),
    HWIO layout.  compute_dtype = dtype of the MXU matmul operands
    (jnp.bfloat16 for v6e/v7x throughput, jnp.float32 for exact parity);
    accumulation and all elementwise math stay f32."""
    N, C, H, W = x_nchw.shape
    Cmid = w1.shape[3]
    Cout = w2.shape[3]
    assert Cout == C, "residual add requires in_channels == out_channels"
    # TODO(synk): stride!=1, dilation!=1, downsample and spectral_norm
    # configurations of BottleneckBlock are not implemented here.

    # Glue: NCHW -> lane-dense (N, H, W*C) layout (free reshape after transpose).
    x2d = jnp.transpose(x_nchw, (0, 2, 3, 1)).reshape(N, H, W * C)

    # Precompute banded weights / tiled biases once (pure JAX, outside kernel).
    w1b = _banded_conv_weights(w1, W).astype(compute_dtype)   # (3, W*C,    W*Cmid)
    w2b = _banded_conv_weights(w2, W).astype(compute_dtype)   # (3, W*Cmid, W*Cout)
    b1row = jnp.tile(b1, W).reshape(1, W * Cmid).astype(jnp.float32)
    b2row = jnp.tile(b2, W).reshape(1, W * Cout).astype(jnp.float32)

    out2d = pl.pallas_call(
        bottleneck_kernel,
        out_shape=jax.ShapeDtypeStruct((N, H, W * Cout), jnp.float32),
        grid_spec=pltpu.PrefetchScalarGridSpec(
            num_scalar_prefetch=0,
            grid=(N,),                    # N=2 -> one item per v7x TensorCore
            in_specs=[
                pl.BlockSpec((1, H, W * C), lambda n: (n, 0, 0)),
                pl.BlockSpec((3, W * C, W * Cmid), lambda n: (0, 0, 0)),
                pl.BlockSpec((1, W * Cmid), lambda n: (0, 0)),
                pl.BlockSpec((3, W * Cmid, W * Cout), lambda n: (0, 0, 0)),
                pl.BlockSpec((1, W * Cout), lambda n: (0, 0)),
            ],
            out_specs=pl.BlockSpec((1, H, W * Cout), lambda n: (n, 0, 0)),
            scratch_shapes=[
                pltpu.VMEM((H + 2, W * C), compute_dtype),
                pltpu.VMEM((H + 2, W * Cmid), compute_dtype),
            ],
        ),
        compiler_params=pltpu.CompilerParams(
            dimension_semantics=("parallel",)),
    )(x2d, w1b, b1row, w2b, b2row)

    # Glue: (N, H, W*Cout) -> NCHW to match the PyTorch output convention.
    return jnp.transpose(out2d.reshape(N, H, W, Cout), (0, 3, 1, 2))


# --------------------------------------------------------------------------- #
# Plain-JAX reference (lax.conv) for correctness checking
# --------------------------------------------------------------------------- #
def reference_forward(x_nchw, w1, b1, w2, b2):
    x = jnp.transpose(x_nchw, (0, 2, 3, 1))  # NHWC
    dn = ("NHWC", "HWIO", "NHWC")
    h = lax.conv_general_dilated(x, w1, (1, 1), [(1, 1), (1, 1)],
                                 dimension_numbers=dn) + b1.reshape(1, 1, 1, -1)
    h = jnp.tanh(h)
    y = lax.conv_general_dilated(h, w2, (1, 1), [(1, 1), (1, 1)],
                                 dimension_numbers=dn) + b2.reshape(1, 1, 1, -1)
    out = jnp.tanh(y + x)
    return jnp.transpose(out, (0, 3, 1, 2))


if __name__ == "__main__":
    # Small shapes consistent with the module: N=2, C_in=C_out=4, 16x16 spatial.
    N, C, H, W = 2, 4, 16, 16
    Cmid = 2 * C  # out_channels * 2 for the first conv

    key = jax.random.PRNGKey(0)
    k_x, k_w1, k_b1, k_w2, k_b2 = jax.random.split(key, 5)

    x = jax.random.normal(k_x, (N, C, H, W), dtype=jnp.float32)
    w1 = jax.random.normal(k_w1, (3, 3, C, Cmid), jnp.float32) * (1.0 / (9 * C)) ** 0.5
    b1 = jax.random.normal(k_b1, (Cmid,), jnp.float32) * 0.1
    w2 = jax.random.normal(k_w2, (3, 3, Cmid, C), jnp.float32) * (1.0 / (9 * Cmid)) ** 0.5
    b2 = jax.random.normal(k_b2, (C,), jnp.float32) * 0.1

    ref = jax.block_until_ready(reference_forward(x, w1, b1, w2, b2))

    # Exact-parity mode (f32 MXU operands): proves the structural changes
    # preserve the module semantics.
    out_f32 = jax.block_until_ready(
        bottleneck_block(x, w1, b1, w2, b2, compute_dtype=jnp.float32))
    assert out_f32.shape == (N, C, H, W)
    assert jnp.max(jnp.abs(out_f32 - ref)) < 1e-4, "f32 kernel mismatch vs reference"

    # Throughput mode for v6e/v7x (bf16 MXU operands, f32 accumulation).
    out_bf16 = jax.block_until_ready(
        bottleneck_block(x, w1, b1, w2, b2, compute_dtype=jnp.bfloat16))
    assert out_bf16.shape == (N, C, H, W)
    assert jnp.max(jnp.abs(out_bf16 - ref)) < 5e-2, "bf16 kernel mismatch vs reference"

    print("KERNEL_OK")
</pallas_src>

<mosaic_0001>
module attributes {stable_mosaic.version = 11 : i64} {
  func.func @bottleneck_kernel(%arg0: i32, %arg1: memref<1x16x64xf32, #tpu.memory_space<vmem>>, %arg2: memref<3x64x128xf32, #tpu.memory_space<vmem>>, %arg3: memref<1x128xf32, #tpu.memory_space<vmem>>, %arg4: memref<3x128x64xf32, #tpu.memory_space<vmem>>, %arg5: memref<1x64xf32, #tpu.memory_space<vmem>>, %arg6: memref<1x16x64xf32, #tpu.memory_space<vmem>>, %arg7: memref<18x64xf32, #tpu.memory_space<vmem>>, %arg8: memref<18x128xf32, #tpu.memory_space<vmem>>) attributes {dimension_semantics = [#tpu.dimension_semantics<parallel>], iteration_bounds = array<i64: 2>, scalar_prefetch = 0 : i64, scratch_operands = 2 : i64, tpu.core_type = #tpu.core_type<tc>, window_params = [{transform_indices = @transform_0, window_bounds = array<i64: 1, 16, 64>}, {pipeline_mode = #tpu.pipeline_mode<synchronous>, transform_indices = @transform_1, window_bounds = array<i64: 3, 64, 128>}, {pipeline_mode = #tpu.pipeline_mode<synchronous>, transform_indices = @transform_2, window_bounds = array<i64: 1, 128>}, {pipeline_mode = #tpu.pipeline_mode<synchronous>, transform_indices = @transform_3, window_bounds = array<i64: 3, 128, 64>}, {pipeline_mode = #tpu.pipeline_mode<synchronous>, transform_indices = @transform_4, window_bounds = array<i64: 1, 64>}, {transform_indices = @transform_5, window_bounds = array<i64: 1, 16, 64>}]} {
    %c0 = arith.constant 0 : index
    %c0_0 = arith.constant 0 : index
    %c0_1 = arith.constant 0 : index
    %0 = vector.load %arg1[%c0, %c0_0, %c0_1] : memref<1x16x64xf32, #tpu.memory_space<vmem>>, vector<1x16x64xf32>
    %1 = vector.shape_cast %0 : vector<1x16x64xf32> to vector<16x64xf32>
    %cst = arith.constant 0.000000e+00 : f32
    %2 = vector.broadcast %cst : f32 to vector<1x64xf32>
    %c0_2 = arith.constant 0 : index
    %c0_3 = arith.constant 0 : index
    %3 = vector.load %arg7[%c0_2, %c0_3] : memref<18x64xf32, #tpu.memory_space<vmem>>, vector<1x64xf32>
    tpu.vector_store %arg7[%c0_2, %c0_3], %2 {strides = array<i32>} : memref<18x64xf32, #tpu.memory_space<vmem>>, vector<1x64xf32>,
    %cst_4 = arith.constant 0.000000e+00 : f32
    %4 = vector.broadcast %cst_4 : f32 to vector<1x64xf32>
    %c17 = arith.constant 17 : index
    %c0_5 = arith.constant 0 : index
    %5 = vector.load %arg7[%c17, %c0_5] : memref<18x64xf32, #tpu.memory_space<vmem>>, vector<1x64xf32>
    tpu.vector_store %arg7[%c17, %c0_5], %4 {strides = array<i32>} : memref<18x64xf32, #tpu.memory_space<vmem>>, vector<1x64xf32>,
    %c1 = arith.constant 1 : index
    %c0_6 = arith.constant 0 : index
    %6 = vector.load %arg7[%c1, %c0_6] : memref<18x64xf32, #tpu.memory_space<vmem>>, vector<16x64xf32>
    tpu.vector_store %arg7[%c1, %c0_6], %1 {strides = array<i32>} : memref<18x64xf32, #tpu.memory_space<vmem>>, vector<16x64xf32>,
    %cst_7 = arith.constant 0.000000e+00 : f32
    %7 = vector.broadcast %cst_7 : f32 to vector<16x128xf32>
    %c0_8 = arith.constant 0 : index
    %c0_9 = arith.constant 0 : index
    %8 = vector.load %arg7[%c0_8, %c0_9] : memref<18x64xf32, #tpu.memory_space<vmem>>, vector<16x64xf32>
    %c0_10 = arith.constant 0 : index
    %c0_11 = arith.constant 0 : index
    %c0_12 = arith.constant 0 : index
    %9 = vector.load %arg2[%c0_10, %c0_11, %c0_12] : memref<3x64x128xf32, #tpu.memory_space<vmem>>, vector<1x64x128xf32>
    %10 = vector.shape_cast %9 : vector<1x64x128xf32> to vector<64x128xf32>
    %cst_13 = arith.constant dense<0.000000e+00> : vector<16x128xf32>
    %11 = tpu.matmul %8, %10, %cst_13 {dimension_numbers = #tpu.dot_dimension_numbers<[1], [0], [0], [1], [0, 0, 1, 1], [], []>} : vector<16x64xf32>, vector<64x128xf32>, vector<16x128xf32> -> vector<16x128xf32>
    %12 = arith.addf %7, %11 : vector<16x128xf32>
    %c1_14 = arith.constant 1 : index
    %c0_15 = arith.constant 0 : index
    %13 = vector.load %arg7[%c1_14, %c0_15] : memref<18x64xf32, #tpu.memory_space<vmem>>, vector<16x64xf32>
    %c1_16 = arith.constant 1 : index
    %c0_17 = arith.constant 0 : index
    %c0_18 = arith.constant 0 : index
    %14 = vector.load %arg2[%c1_16, %c0_17, %c0_18] : memref<3x64x128xf32, #tpu.memory_space<vmem>>, vector<1x64x128xf32>
    %15 = vector.shape_cast %14 : vector<1x64x128xf32> to vector<64x128xf32>
    %cst_19 = arith.constant dense<0.000000e+00> : vector<16x128xf32>
    %16 = tpu.matmul %13, %15, %cst_19 {dimension_numbers = #tpu.dot_dimension_numbers<[1], [0], [0], [1], [0, 0, 1, 1], [], []>} : vector<16x64xf32>, vector<64x128xf32>, vector<16x128xf32> -> vector<16x128xf32>
    %17 = arith.addf %12, %16 : vector<16x128xf32>
    %c2 = arith.constant 2 : index
    %c0_20 = arith.constant 0 : index
    %18 = vector.load %arg7[%c2, %c0_20] : memref<18x64xf32, #tpu.memory_space<vmem>>, vector<16x64xf32>
    %c2_21 = arith.constant 2 : index
    %c0_22 = arith.constant 0 : index
    %c0_23 = arith.constant 0 : index
    %19 = vector.load %arg2[%c2_21, %c0_22, %c0_23] : memref<3x64x128xf32, #tpu.memory_space<vmem>>, vector<1x64x128xf32>
    %20 = vector.shape_cast %19 : vector<1x64x128xf32> to vector<64x128xf32>
    %cst_24 = arith.constant dense<0.000000e+00> : vector<16x128xf32>
    %21 = tpu.matmul %18, %20, %cst_24 {dimension_numbers = #tpu.dot_dimension_numbers<[1], [0], [0], [1], [0, 0, 1, 1], [], []>} : vector<16x64xf32>, vector<64x128xf32>, vector<16x128xf32> -> vector<16x128xf32>
    %22 = arith.addf %17, %21 : vector<16x128xf32>
    %c0_25 = arith.constant 0 : index
    %c0_26 = arith.constant 0 : index
    %23 = vector.load %arg3[%c0_25, %c0_26] : memref<1x128xf32, #tpu.memory_space<vmem>>, vector<1x128xf32>
    %24 = vector.broadcast %23 : vector<1x128xf32> to vector<16x128xf32>
    %25 = arith.addf %22, %24 : vector<16x128xf32>
    %26 = math.tanh %25 : vector<16x128xf32>
    %cst_27 = arith.constant 0.000000e+00 : f32
    %27 = vector.broadcast %cst_27 : f32 to vector<1x128xf32>
    %c0_28 = arith.constant 0 : index
    %c0_29 = arith.constant 0 : index
    %28 = vector.load %arg8[%c0_28, %c0_29] : memref<18x128xf32, #tpu.memory_space<vmem>>, vector<1x128xf32>
    tpu.vector_store %arg8[%c0_28, %c0_29], %27 {strides = array<i32>} : memref<18x128xf32, #tpu.memory_space<vmem>>, vector<1x128xf32>,
    %cst_30 = arith.constant 0.000000e+00 : f32
    %29 = vector.broadcast %cst_30 : f32 to vector<1x128xf32>
    %c17_31 = arith.constant 17 : index
    %c0_32 = arith.constant 0 : index
    %30 = vector.load %arg8[%c17_31, %c0_32] : memref<18x128xf32, #tpu.memory_space<vmem>>, vector<1x128xf32>
    tpu.vector_store %arg8[%c17_31, %c0_32], %29 {strides = array<i32>} : memref<18x128xf32, #tpu.memory_space<vmem>>, vector<1x128xf32>,
    %c1_33 = arith.constant 1 : index
    %c0_34 = arith.constant 0 : index
    %31 = vector.load %arg8[%c1_33, %c0_34] : memref<18x128xf32, #tpu.memory_space<vmem>>, vector<16x128xf32>
    tpu.vector_store %arg8[%c1_33, %c0_34], %26 {strides = array<i32>} : memref<18x128xf32, #tpu.memory_space<vmem>>, vector<16x128xf32>,
    %cst_35 = arith.constant 0.000000e+00 : f32
    %32 = vector.broadcast %cst_35 : f32 to vector<16x64xf32>
    %c0_36 = arith.constant 0 : index
    %c0_37 = arith.constant 0 : index
    %33 = vector.load %arg8[%c0_36, %c0_37] : memref<18x128xf32, #tpu.memory_space<vmem>>, vector<16x128xf32>
    %c0_38 = arith.constant 0 : index
    %c0_39 = arith.constant 0 : index
    %c0_40 = arith.constant 0 : index
    %34 = vector.load %arg4[%c0_38, %c0_39, %c0_40] : memref<3x128x64xf32, #tpu.memory_space<vmem>>, vector<1x128x64xf32>
    %35 = vector.shape_cast %34 : vector<1x128x64xf32> to vector<128x64xf32>
    %cst_41 = arith.constant dense<0.000000e+00> : vector<16x64xf32>
    %36 = tpu.matmul %33, %35, %cst_41 {dimension_numbers = #tpu.dot_dimension_numbers<[1], [0], [0], [1], [0, 0, 1, 1], [], []>} : vector<16x128xf32>, vector<128x64xf32>, vector<16x64xf32> -> vector<16x64xf32>
    %37 = arith.addf %32, %36 : vector<16x64xf32>
    %c1_42 = arith.constant 1 : index
    %c0_43 = arith.constant 0 : index
    %38 = vector.load %arg8[%c1_42, %c0_43] : memref<18x128xf32, #tpu.memory_space<vmem>>, vector<16x128xf32>
    %c1_44 = arith.constant 1 : index
    %c0_45 = arith.constant 0 : index
    %c0_46 = arith.constant 0 : index
    %39 = vector.load %arg4[%c1_44, %c0_45, %c0_46] : memref<3x128x64xf32, #tpu.memory_space<vmem>>, vector<1x128x64xf32>
    %40 = vector.shape_cast %39 : vector<1x128x64xf32> to vector<128x64xf32>
    %cst_47 = arith.constant dense<0.000000e+00> : vector<16x64xf32>
    %41 = tpu.matmul %38, %40, %cst_47 {dimension_numbers = #tpu.dot_dimension_numbers<[1], [0], [0], [1], [0, 0, 1, 1], [], []>} : vector<16x128xf32>, vector<128x64xf32>, vector<16x64xf32> -> vector<16x64xf32>
    %42 = arith.addf %37, %41 : vector<16x64xf32>
    %c2_48 = arith.constant 2 : index
    %c0_49 = arith.constant 0 : index
    %43 = vector.load %arg8[%c2_48, %c0_49] : memref<18x128xf32, #tpu.memory_space<vmem>>, vector<16x128xf32>
    %c2_50 = arith.constant 2 : index
    %c0_51 = arith.constant 0 : index
    %c0_52 = arith.constant 0 : index
    %44 = vector.load %arg4[%c2_50, %c0_51, %c0_52] : memref<3x128x64xf32, #tpu.memory_space<vmem>>, vector<1x128x64xf32>
    %45 = vector.shape_cast %44 : vector<1x128x64xf32> to vector<128x64xf32>
    %cst_53 = arith.constant dense<0.000000e+00> : vector<16x64xf32>
    %46 = tpu.matmul %43, %45, %cst_53 {dimension_numbers = #tpu.dot_dimension_numbers<[1], [0], [0], [1], [0, 0, 1, 1], [], []>} : vector<16x128xf32>, vector<128x64xf32>, vector<16x64xf32> -> vector<16x64xf32>
    %47 = arith.addf %42, %46 : vector<16x64xf32>
    %c0_54 = arith.constant 0 : index
    %c0_55 = arith.constant 0 : index
    %48 = vector.load %arg5[%c0_54, %c0_55] : memref<1x64xf32, #tpu.memory_space<vmem>>, vector<1x64xf32>
    %49 = vector.broadcast %48 : vector<1x64xf32> to vector<16x64xf32>
    %50 = arith.addf %47, %49 : vector<16x64xf32>
    %51 = arith.addf %50, %1 : vector<16x64xf32>
    %52 = math.tanh %51 : vector<16x64xf32>
    %c0_56 = arith.constant 0 : index
    %c0_57 = arith.constant 0 : index
    %c0_58 = arith.constant 0 : index
    %53 = vector.load %arg6[%c0_56, %c0_57, %c0_58] : memref<1x16x64xf32, #tpu.memory_space<vmem>>, vector<1x16x64xf32>
    %54 = vector.shape_cast %53 : vector<1x16x64xf32> to vector<16x64xf32>
    %55 = vector.shape_cast %52 : vector<16x64xf32> to vector<1x16x64xf32>
    tpu.vector_store %arg6[%c0_56, %c0_57, %c0_58], %55 {strides = array<i32>} : memref<1x16x64xf32, #tpu.memory_space<vmem>>, vector<1x16x64xf32>,
    return
  }
  func.func @transform_0(%arg0: i32) -> (i32, i32, i32) {
    %c0_i32 = arith.constant 0 : i32
    %c0_i32_0 = arith.constant 0 : i32
    %c0_i32_1 = arith.constant 0 : i32
    return %arg0, %c0_i32, %c0_i32_0 : i32, i32, i32
  }
  func.func @transform_1(%arg0: i32) -> (i32, i32, i32) {
    %c0_i32 = arith.constant 0 : i32
    %c0_i32_0 = arith.constant 0 : i32
    %c0_i32_1 = arith.constant 0 : i32
    %c0_i32_2 = arith.constant 0 : i32
    return %c0_i32, %c0_i32_0, %c0_i32_1 : i32, i32, i32
  }
  func.func @transform_2(%arg0: i32) -> (i32, i32) {
    %c0_i32 = arith.constant 0 : i32
    %c0_i32_0 = arith.constant 0 : i32
    %c0_i32_1 = arith.constant 0 : i32
    return %c0_i32, %c0_i32_0 : i32, i32
  }
  func.func @transform_3(%arg0: i32) -> (i32, i32, i32) {
    %c0_i32 = arith.constant 0 : i32
    %c0_i32_0 = arith.constant 0 : i32
    %c0_i32_1 = arith.constant 0 : i32
    %c0_i32_2 = arith.constant 0 : i32
    return %c0_i32, %c0_i32_0, %c0_i32_1 : i32, i32, i32
  }
  func.func @transform_4(%arg0: i32) -> (i32, i32) {
    %c0_i32 = arith.constant 0 : i32
    %c0_i32_0 = arith.constant 0 : i32
    %c0_i32_1 = arith.constant 0 : i32
    return %c0_i32, %c0_i32_0 : i32, i32
  }
  func.func @transform_5(%arg0: i32) -> (i32, i32, i32) {
    %c0_i32 = arith.constant 0 : i32
    %c0_i32_0 = arith.constant 0 : i32
    %c0_i32_1 = arith.constant 0 : i32
    return %arg0, %c0_i32, %c0_i32_0 : i32, i32, i32
  }
}

</mosaic_0001>

<llo_original>
// kernel: tpu_custom_call.1
$region0: #{tpu_custom_call.1}
  #allocation0 [shape = 'u32[]', space=smem, size = 0x4, offset = 0x4, fixed_abs, tag = 'smem constant byte address 0x4 - core index']
  #allocation1 [shape = 'u32[144,128]{1,0:T(1,128)}', space=vmem, size = 0x12000, scoped, tag = 'internal scratch']
  #allocation2 [shape = 'f32[18,64]{1,0:T(8,128)}', space=vmem, size = 0x3000, scoped, tag = 'scratch operand']
  #allocation3 [shape = 'f32[18,128]{1,0:T(8,128)}', space=vmem, size = 0x3000, scoped, tag = 'scratch operand']
  %s0 = inlined_call_operand.vmem [shape: f32[2,16,64], index: 0, kind: input, shape index: {}]
  %s1 = inlined_call_operand.vmem [shape: f32[3,64,128], index: 1, kind: input, shape index: {}]
  %s2 = inlined_call_operand.vmem [shape: f32[1,128], index: 2, kind: input, shape index: {}]
  %s3 = inlined_call_operand.vmem [shape: f32[3,128,64], index: 3, kind: input, shape index: {}]
  %s4 = inlined_call_operand.vmem [shape: f32[1,64], index: 4, kind: input, shape index: {}]
  %s5 = inlined_call_operand.hbm [shape: f32[2,16,64], index: 5, kind: output, shape index: {}]
  %s6 = sld [smem:[#allocation0]]
  $region53: #{tpu_custom_call.1} parent=0
    _
  %s8 = ssub.s32 1, %s6
  %s9 = scalar_select 0, %s8, %s6
  $region1: #{tpu_custom_call.1} parent=0
    #allocation4 [shape = 'u8[16384]{0}', space=vmem, size = 0x4000, scoped, tag = 'output window, operand 0']
    #allocation5 [shape = 's32[2]{0}', space=sflag, size = 0x8, scoped, tag = 'scoped memory for tpu_custom_call.1']
    %10 = vsyncpa [#allocation5], 0
    %s11 = scalar_lea.sflag [#allocation5], 1
    %12 = vsyncpa %s11, 0
    loop: start=0, step=1, limit=4
    $region2: #{tpu_custom_call.1} parent=1 // loop_pre_header
      _
    $region3: #{tpu_custom_call.1} parent=1 // loop_header
      %s14 = sphi 0, %s18
      %p15 = scmp.ge.s32.totalorder %s14, 4
      %s24 = sphi 0, %s26
      %s27 = sphi 0, %s24
      %s28 = sphi 0, %s27
      %s44 = sphi 0, %s28
      %s48 = sphi 0, %s48
      %s50 = sphi 0, %s48
      %s51 = sphi 0, %s50
      %s65 = sphi 0, %s51
      %s69 = sphi 0, %s69
      %s71 = sphi 0, %s69
      %s72 = sphi 0, %s71
      %s86 = sphi 0, %s72
      %s90 = sphi 0, %s90
      %s92 = sphi 0, %s90
      %s93 = sphi 0, %s92
      %s107 = sphi 0, %s93
      %s111 = sphi 0, %s111
      %s113 = sphi 0, %s111
      %s114 = sphi 0, %s113
      %s128 = sphi 0, %s114
      %s134 = sphi 0, %s136
      %s137 = sphi 0, %s134
      %s138 = sphi 0, %s137
      %s154 = sphi 0, %s138
    $region4: #{tpu_custom_call.1} parent=1 // loop_header_branch
      %17 = sbr.rel (%p15) target = $region8
    $region5: #{tpu_custom_call.1} parent=1 // loop_body
      %s19 = ssub.s32 %s14, 1
      %s20 = ssub.s32 %s14, 2
      %s21 = sadd.s32 %s14, 1
      %s22 = ssub.s32 %s14, %s21
      %p23 = scmp.eq.s32.totalorder %s22, 0
      %s25 = sadd.s32 %s24, 1
      %s26 = scalar_select %p23, %s24, %s25
      %p29 = pneg %p23
      %p30 = scmp.eq.s32.totalorder %s14, 1
      %p31 = por %p29, %p30
      %p32 = scmp.ne.s32.totalorder %s24, %s27
      %p33 = scmp.eq.s32.totalorder %s14, 0
      %p34 = por %p32, %p33
      %p35 = scmp.ne.s32.totalorder %s24, %s27
      %p36 = scmp.eq.s32.totalorder %s19, 1
      %p37 = por %p35, %p36
      %p38 = scmp.ne.s32.totalorder %s27, %s28
      %p39 = scmp.eq.s32.totalorder %s19, 0
      %p40 = por %p38, %p39
      %p41 = scmp.ne.s32.totalorder %s27, %s28
      %p42 = scmp.eq.s32.totalorder %s20, 1
      %p43 = por %p41, %p42
      %p45 = scmp.ne.s32.totalorder %s28, %s44
      %p46 = scmp.eq.s32.totalorder %s20, 0
      %p47 = por %p45, %p46
      %s49 = sadd.s32 %s48, 1
      %p52 = scmp.eq.s32.totalorder %s14, 1
      %p53 = scmp.ne.s32.totalorder %s48, %s50
      %p54 = scmp.eq.s32.totalorder %s14, 0
      %p55 = por %p53, %p54
      %p56 = scmp.ne.s32.totalorder %s48, %s50
      %p57 = scmp.eq.s32.totalorder %s19, 1
      %p58 = por %p56, %p57
      %p59 = scmp.ne.s32.totalorder %s50, %s51
      %p60 = scmp.eq.s32.totalorder %s19, 0
      %p61 = por %p59, %p60
      %p62 = scmp.ne.s32.totalorder %s50, %s51
      %p63 = scmp.eq.s32.totalorder %s20, 1
      %p64 = por %p62, %p63
      %p66 = scmp.ne.s32.totalorder %s51, %s65
      %p67 = scmp.eq.s32.totalorder %s20, 0
      %p68 = por %p66, %p67
      %s70 = sadd.s32 %s69, 1
      %p73 = scmp.eq.s32.totalorder %s14, 1
      %p74 = scmp.ne.s32.totalorder %s69, %s71
      %p75 = scmp.eq.s32.totalorder %s14, 0
      %p76 = por %p74, %p75
      %p77 = scmp.ne.s32.totalorder %s69, %s71
      %p78 = scmp.eq.s32.totalorder %s19, 1
      %p79 = por %p77, %p78
      %p80 = scmp.ne.s32.totalorder %s71, %s72
      %p81 = scmp.eq.s32.totalorder %s19, 0
      %p82 = por %p80, %p81
      %p83 = scmp.ne.s32.totalorder %s71, %s72
      %p84 = scmp.eq.s32.totalorder %s20, 1
      %p85 = por %p83, %p84
      %p87 = scmp.ne.s32.totalorder %s72, %s86
      %p88 = scmp.eq.s32.totalorder %s20, 0
      %p89 = por %p87, %p88
      %s91 = sadd.s32 %s90, 1
      %p94 = scmp.eq.s32.totalorder %s14, 1
      %p95 = scmp.ne.s32.totalorder %s90, %s92
      %p96 = scmp.eq.s32.totalorder %s14, 0
      %p97 = por %p95, %p96
      %p98 = scmp.ne.s32.totalorder %s90, %s92
      %p99 = scmp.eq.s32.totalorder %s19, 1
      %p100 = por %p98, %p99
      %p101 = scmp.ne.s32.totalorder %s92, %s93
      %p102 = scmp.eq.s32.totalorder %s19, 0
      %p103 = por %p101, %p102
      %p104 = scmp.ne.s32.totalorder %s92, %s93
      %p105 = scmp.eq.s32.totalorder %s20, 1
      %p106 = por %p104, %p105
      %p108 = scmp.ne.s32.totalorder %s93, %s107
      %p109 = scmp.eq.s32.totalorder %s20, 0
      %p110 = por %p108, %p109
      %s112 = sadd.s32 %s111, 1
      %p115 = scmp.eq.s32.totalorder %s14, 1
      %p116 = scmp.ne.s32.totalorder %s111, %s113
      %p117 = scmp.eq.s32.totalorder %s14, 0
      %p118 = por %p116, %p117
      %p119 = scmp.ne.s32.totalorder %s111, %s113
      %p120 = scmp.eq.s32.totalorder %s19, 1
      %p121 = por %p119, %p120
      %p122 = scmp.ne.s32.totalorder %s113, %s114
      %p123 = scmp.eq.s32.totalorder %s19, 0
      %p124 = por %p122, %p123
      %p125 = scmp.ne.s32.totalorder %s113, %s114
      %p126 = scmp.eq.s32.totalorder %s20, 1
      %p127 = por %p125, %p126
      %p129 = scmp.ne.s32.totalorder %s114, %s128
      %p130 = scmp.eq.s32.totalorder %s20, 0
      %p131 = por %p129, %p130
      %s132 = ssub.s32 %s14, %s21
      %p133 = scmp.eq.s32.totalorder %s132, 0
      %s135 = sadd.s32 %s134, 1
      %s136 = scalar_select %p133, %s134, %s135
      %p139 = pneg %p133
      %p140 = scmp.eq.s32.totalorder %s14, 1
      %p141 = por %p139, %p140
      %p142 = scmp.ne.s32.totalorder %s134, %s137
      %p143 = scmp.eq.s32.totalorder %s14, 0
      %p144 = por %p142, %p143
      %p145 = scmp.ne.s32.totalorder %s134, %s137
      %p146 = scmp.eq.s32.totalorder %s19, 1
      %p147 = por %p145, %p146
      %p148 = scmp.ne.s32.totalorder %s137, %s138
      %p149 = scmp.eq.s32.totalorder %s19, 0
      %p150 = por %p148, %p149
      %p151 = scmp.ne.s32.totalorder %s137, %s138
      %p152 = scmp.eq.s32.totalorder %s20, 1
      %p153 = por %p151, %p152
      %p155 = scmp.ne.s32.totalorder %s138, %s154
      %p156 = scmp.eq.s32.totalorder %s20, 0
      %p157 = por %p155, %p156
      %p158 = scmp.le.s32.totalorder 1, %s14
      %p159 = scmp.lt.s32.totalorder %s14, 3
      %p160 = pnand %p158, %p159
      %p161 = pneg %p160
      // Predicated region
      $region9: #{tpu_custom_call.1} parent=5 // pred_check
        _
      $region10: #{tpu_custom_call.1} parent=5 // pred_check_branch
        %163 = sbr.rel (%p160) target = $region12
      $region11: #{tpu_custom_call.1} parent=5 // pred_region
        %s164 = ssub.s32 %s14, 1
        // Predicated region
        $region13: #{tpu_custom_call.1} parent=11 // pred_check
          %p165 = pneg %p61
        $region14: #{tpu_custom_call.1} parent=11 // pred_check_branch
          %167 = sbr.rel (%p165) target = $region16
        $region15: #{tpu_custom_call.1} parent=11 // pred_region
          _
        $region16: #{tpu_custom_call.1} parent=11 // pred_fallthru
          _
        // Predicated region
        $region17: #{tpu_custom_call.1} parent=11 // pred_check
          %p168 = pneg %p82
        $region18: #{tpu_custom_call.1} parent=11 // pred_check_branch
          %170 = sbr.rel (%p168) target = $region20
        $region19: #{tpu_custom_call.1} parent=11 // pred_region
          _
        $region20: #{tpu_custom_call.1} parent=11 // pred_fallthru
          _
        // Predicated region
        $region21: #{tpu_custom_call.1} parent=11 // pred_check
          %p171 = pneg %p103
        $region22: #{tpu_custom_call.1} parent=11 // pred_check_branch
          %173 = sbr.rel (%p171) target = $region24
        $region23: #{tpu_custom_call.1} parent=11 // pred_region
          _
        $region24: #{tpu_custom_call.1} parent=11 // pred_fallthru
          _
        // Predicated region
        $region25: #{tpu_custom_call.1} parent=11 // pred_check
          %p174 = pneg %p124
        $region26: #{tpu_custom_call.1} parent=11 // pred_check_branch
          %176 = sbr.rel (%p174) target = $region28
        $region27: #{tpu_custom_call.1} parent=11 // pred_region
          _
        $region28: #{tpu_custom_call.1} parent=11 // pred_fallthru
          _
      $region12: #{tpu_custom_call.1} parent=5 // pred_fallthru
        _
      %p177 = scmp.lt.s32.totalorder %s14, 2
      // Predicated region
      $region29: #{tpu_custom_call.1} parent=5 // pred_check
        %p178 = pneg %p177
      $region30: #{tpu_custom_call.1} parent=5 // pred_check_branch
        %180 = sbr.rel (%p178) target = $region32
      $region31: #{tpu_custom_call.1} parent=5 // pred_region
        // Predicated region
        $region33: #{tpu_custom_call.1} parent=31 // pred_check
          %p181 = pneg %p34
        $region34: #{tpu_custom_call.1} parent=31 // pred_check_branch
          %183 = sbr.rel (%p181) target = $region36
        $region35: #{tpu_custom_call.1} parent=31 // pred_region
          %p184 = scmp.lt.s32.totalorder %s14, 1
          %s185 = scalar_select %p184, %s14, 1
          %s186 = smul.addr %s185, 2
          %s187 = smul.addr %s186, 8
          %s188 = scalar_lea.vmem %s0, %s187
        $region36: #{tpu_custom_call.1} parent=31 // pred_fallthru
          _
      $region32: #{tpu_custom_call.1} parent=5 // pred_fallthru
        _
      %p189 = scmp.le.s32.totalorder 1, %s14
      %p190 = scmp.lt.s32.totalorder %s14, 3
      %p191 = pnand %p189, %p190
      %p192 = pneg %p191
      // Predicated region
      $region37: #{tpu_custom_call.1} parent=5 // pred_check
        _
      $region38: #{tpu_custom_call.1} parent=5 // pred_check_branch
        %194 = sbr.rel (%p191) target = $region40
      $region39: #{tpu_custom_call.1} parent=5 // pred_region
        %s195 = ssub.s32 %s14, 1
        %p196 = scmp.lt.s32.totalorder %s19, 1
        %s197 = scalar_select %p196, %s19, 1
        %s198 = smul.addr %s197, 2
        %s199 = smul.addr %s198, 8
        %s200 = scalar_lea.vmem %s0, %s199
        %p201 = pneg %p40
        %p202 = pneg %p37
        %p203 = pneg %p61
        %p204 = pneg %p58
        %p205 = pneg %p82
        %p206 = pneg %p79
        %p207 = pneg %p103
        %p208 = pneg %p100
        %p209 = pneg %p124
        %p210 = pneg %p121
        %p211 = pneg %p150
        %p212 = pneg %p147
        %s213 = sand.u32 %s137, 1
        %s214 = scalar_lea.sflag [#allocation5], %s213
        %s215 = sand.u32 %s137, 1
        %s216 = smul.addr %s215, 16
        %s217 = scalar_lea.vmem [#allocation4], %s216
        %p218 = scmp.lt.s32.totalorder %s19, 1
        %s219 = scalar_select %p218, %s19, 1
        %s220 = smul.addr %s219, 2
        %s221 = smul.addr %s220, 8
        %s222 = scalar_lea.vmem %s0, %s221
        %v223 = vld [vmem:[%s222] sm:$0xff]
        %v224 = vld [vmem:[%s222 + $0x8] sm:$0xff]
        %vm225 = vcmask 516096
        %226 = vst.msk [vmem:[#allocation2] sm:$0x1] %vm225, 0.0
        %227 = vst.msk [vmem:[#allocation2 + $0x11] sm:$0x1] %vm225, 0.0
        %vm228 = vcmask 523264
        %229 = vst.msk [vmem:[#allocation2 + $0x1] sm:$0xff] %vm228, %v223
        %230 = vst.msk [vmem:[#allocation2 + $0x9] sm:$0xff] %vm228, %v224
        %v231 = vld [vmem:[#allocation2] sm:$0xff]
        %v232 = vld [vmem:[#allocation2 + $0x8] sm:$0xff]
        %v233 = vld [vmem:[%s1] sm:$0xff]
        %v234 = vld [vmem:[%s1 + $0x8] sm:$0xff]
        %v235 = vld [vmem:[%s1 + $0x10] sm:$0xff]
        %v236 = vld [vmem:[%s1 + $0x18] sm:$0xff]
        %v237 = vld [vmem:[%s1 + $0x20] sm:$0xff]
        %v238 = vld [vmem:[%s1 + $0x28] sm:$0xff]
        %v239 = vld [vmem:[%s1 + $0x30] sm:$0xff]
        %v240 = vld [vmem:[%s1 + $0x38] sm:$0xff]
        %v241 = vld [vmem:[#allocation2 + $0x1] sm:$0xff]
        %v242 = vld [vmem:[#allocation2 + $0x9] sm:$0xff]
        %s243 = scalar_lea.vmem %s1, 64
        %v244 = vld [vmem:[%s243] sm:$0xff]
        %v245 = vld [vmem:[%s243 + $0x8] sm:$0xff]
        %v246 = vld [vmem:[%s243 + $0x10] sm:$0xff]
        %v247 = vld [vmem:[%s243 + $0x18] sm:$0xff]
        %v248 = vld [vmem:[%s243 + $0x20] sm:$0xff]
        %v249 = vld [vmem:[%s243 + $0x28] sm:$0xff]
        %v250 = vld [vmem:[%s243 + $0x30] sm:$0xff]
        %v251 = vld [vmem:[%s243 + $0x38] sm:$0xff]
        %v253 = vsel %vm228, %v241, 0
        %v256 = vsel %vm228, %v242, 0
        %258 = vmatprep.subr.mxu0 0.0
        %259 = vmatpush1.msra.mxu0 %v244
        %260 = vmatprep.subr.mxu0 0.0
        %261 = vmatpush1.msra.mxu0 %v245
        %262 = vmatprep.subr.mxu0 0.0
        %263 = vmatpush1.msra.mxu0 %v246
        %264 = vmatprep.subr.mxu0 0.0
        %265 = vmatpush1.msra.mxu0 %v247
        %266 = vmatprep.subr.mxu0 0.0
        %267 = vmatpush1.msra.mxu0 %v248
        %268 = vmatprep.subr.mxu0 0.0
        %269 = vmatpush1.msra.mxu0 %v249
        %270 = vmatprep.subr.mxu0 0.0
        %271 = vmatpush1.msra.mxu0 %v250
        %272 = vmatprep.subr.mxu0 0.0
        %273 = vmatpush1.msra.mxu0 %v251
        %274 = vmatprep.subr.mxu0 0.0
        %275 = vmatpush1.msra.mxu0 0.0
        %276 = vmatprep.subr.mxu0 0.0
        %277 = vmatpush1.msra.mxu0 0.0
        %278 = vmatprep.subr.mxu0 0.0
        %279 = vmatpush1.msra.mxu0 0.0
        %280 = vmatprep.subr.mxu0 0.0
        %281 = vmatpush1.msra.mxu0 0.0
        %282 = vmatprep.subr.mxu0 0.0
        %283 = vmatpush1.msra.mxu0 0.0
        %284 = vmatprep.subr.mxu0 0.0
        %285 = vmatpush1.msra.mxu0 0.0
        %286 = vmatprep.subr.mxu0 0.0
        %287 = vmatpush1.msra.mxu0 0.0
        %288 = vmatprep.subr.mxu0 0.0
        %289 = vmatpush1.msra.mxu0 0.0
        %290 = vmatprep.subr.mxu0 0.0
        %291 = vmatpush1.msra.mxu0 0.0
        %292 = vmatprep.subr.mxu0 0.0
        %293 = vmatpush1.msra.mxu0 0.0
        %294 = vmatprep.subr.mxu0 0.0
        %295 = vmatpush1.msra.mxu0 0.0
        %296 = vmatprep.subr.mxu0 0.0
        %297 = vmatpush1.msra.mxu0 0.0
        %298 = vmatprep.subr.mxu0 0.0
        %299 = vmatpush1.msra.mxu0 0.0
        %300 = vmatprep.subr.mxu0 0.0
        %301 = vmatpush1.msra.mxu0 0.0
        %302 = vmatprep.subr.mxu0 0.0
        %303 = vmatpush1.msra.mxu0 0.0
        %304 = vmatprep.subr.mxu0 0.0
        %305 = vmatpush1.msra.mxu0 0.0
        %306 = vmatprep.subr.mxu0 0.0
        %307 = vmatpush1.msra.mxu0 0.0
        %308 = vmatprep.subr.mxu0 0.0
        %309 = vmatpush1.msra.mxu0 0.0
        %310 = vmatprep.subr.mxu0 0.0
        %311 = vmatpush1.msra.mxu0 0.0
        %312 = vmatprep.subr.mxu0 0.0
        %313 = vmatpush1.msra.mxu0 0.0
        %314 = vmatprep.subr.mxu0 0.0
        %315 = vmatpush1.msra.mxu0 0.0
        %316 = vmatprep.subr.mxu0 0.0
        %317 = vmatpush1.msra.mxu0 0.0
        %318 = vmatprep.subr.mxu0 0.0
        %319 = vmatpush1.msra.mxu0 0.0
        %320 = vmatprep.subr.mxu0 0.0
        %321 = vmatpush1.msra.mxu0 0.0
        %322 = vmatprep.mubr.f32.mxu0 0.0
        %323 = vmatmul.mubr.f32.gmra.mrb[0].mxu0 %v253
        %v324 = vpop.f32.mrb[0].mxu0
        %v325 = vadd.f32 0.0, %v324
        %v326 = vpop.f32.mrb[0].mxu0
        %327 = vmatprep.mubr.f32.mxu0 0.0
        %328 = vmatmul.mubr.f32.gmra.mrb[0].mxu0 %v256
        %v329 = vpop.f32.mrb[0].mxu0
        %v330 = vadd.f32 0.0, %v329
        %v331 = vpop.f32.mrb[0].mxu0
        %332 = vdwg.mxu0
        %v334 = vsel %vm228, %v231, 0
        %v337 = vsel %vm228, %v232, 0
        %339 = vmatprep.subr.mxu0 0.0
        %340 = vmatpush1.msra.mxu0 %v233
        %341 = vmatprep.subr.mxu0 0.0
        %342 = vmatpush1.msra.mxu0 %v234
        %343 = vmatprep.subr.mxu0 0.0
        %344 = vmatpush1.msra.mxu0 %v235
        %345 = vmatprep.subr.mxu0 0.0
        %346 = vmatpush1.msra.mxu0 %v236
        %347 = vmatprep.subr.mxu0 0.0
        %348 = vmatpush1.msra.mxu0 %v237
        %349 = vmatprep.subr.mxu0 0.0
        %350 = vmatpush1.msra.mxu0 %v238
        %351 = vmatprep.subr.mxu0 0.0
        %352 = vmatpush1.msra.mxu0 %v239
        %353 = vmatprep.subr.mxu0 0.0
        %354 = vmatpush1.msra.mxu0 %v240
        %355 = vmatprep.subr.mxu0 0.0
        %356 = vmatpush1.msra.mxu0 0.0
        %357 = vmatprep.subr.mxu0 0.0
        %358 = vmatpush1.msra.mxu0 0.0
        %359 = vmatprep.subr.mxu0 0.0
        %360 = vmatpush1.msra.mxu0 0.0
        %361 = vmatprep.subr.mxu0 0.0
        %362 = vmatpush1.msra.mxu0 0.0
        %363 = vmatprep.subr.mxu0 0.0
        %364 = vmatpush1.msra.mxu0 0.0
        %365 = vmatprep.subr.mxu0 0.0
        %366 = vmatpush1.msra.mxu0 0.0
        %367 = vmatprep.subr.mxu0 0.0
        %368 = vmatpush1.msra.mxu0 0.0
        %369 = vmatprep.subr.mxu0 0.0
        %370 = vmatpush1.msra.mxu0 0.0
        %371 = vmatprep.subr.mxu0 0.0
        %372 = vmatpush1.msra.mxu0 0.0
        %373 = vmatprep.subr.mxu0 0.0
        %374 = vmatpush1.msra.mxu0 0.0
        %375 = vmatprep.subr.mxu0 0.0
        %376 = vmatpush1.msra.mxu0 0.0
        %377 = vmatprep.subr.mxu0 0.0
        %378 = vmatpush1.msra.mxu0 0.0
        %379 = vmatprep.subr.mxu0 0.0
        %380 = vmatpush1.msra.mxu0 0.0
        %381 = vmatprep.subr.mxu0 0.0
        %382 = vmatpush1.msra.mxu0 0.0
        %383 = vmatprep.subr.mxu0 0.0
        %384 = vmatpush1.msra.mxu0 0.0
        %385 = vmatprep.subr.mxu0 0.0
        %386 = vmatpush1.msra.mxu0 0.0
        %387 = vmatprep.subr.mxu0 0.0
        %388 = vmatpush1.msra.mxu0 0.0
        %389 = vmatprep.subr.mxu0 0.0
        %390 = vmatpush1.msra.mxu0 0.0
        %391 = vmatprep.subr.mxu0 0.0
        %392 = vmatpush1.msra.mxu0 0.0
        %393 = vmatprep.subr.mxu0 0.0
        %394 = vmatpush1.msra.mxu0 0.0
        %395 = vmatprep.subr.mxu0 0.0
        %396 = vmatpush1.msra.mxu0 0.0
        %397 = vmatprep.subr.mxu0 0.0
        %398 = vmatpush1.msra.mxu0 0.0
        %399 = vmatprep.subr.mxu0 0.0
        %400 = vmatpush1.msra.mxu0 0.0
        %401 = vmatprep.subr.mxu0 0.0
        %402 = vmatpush1.msra.mxu0 0.0
        %403 = vmatprep.mubr.f32.mxu0 0.0
        %404 = vmatmul.mubr.f32.gmra.mrb[0].mxu0 %v334
        %v405 = vpop.f32.mrb[0].mxu0
        %v406 = vadd.f32 %v325, %v405
        %v407 = vpop.f32.mrb[0].mxu0
        %408 = vmatprep.mubr.f32.mxu0 0.0
        %409 = vmatmul.mubr.f32.gmra.mrb[0].mxu0 %v337
        %v410 = vpop.f32.mrb[0].mxu0
        %v411 = vadd.f32 %v330, %v410
        %v412 = vpop.f32.mrb[0].mxu0
        %413 = vdwg.mxu0
        %v414 = vld [vmem:[#allocation2 + $0x2] sm:$0xff]
        %v415 = vld [vmem:[#allocation2 + $0xa] sm:$0xff]
        %s416 = scalar_lea.vmem %s1, 128
        %v417 = vld [vmem:[%s416] sm:$0xff]
        %v418 = vld [vmem:[%s416 + $0x8] sm:$0xff]
        %v419 = vld [vmem:[%s416 + $0x10] sm:$0xff]
        %v420 = vld [vmem:[%s416 + $0x18] sm:$0xff]
        %v421 = vld [vmem:[%s416 + $0x20] sm:$0xff]
        %v422 = vld [vmem:[%s416 + $0x28] sm:$0xff]
        %v423 = vld [vmem:[%s416 + $0x30] sm:$0xff]
        %v424 = vld [vmem:[%s416 + $0x38] sm:$0xff]
        %v426 = vsel %vm228, %v414, 0
        %v429 = vsel %vm228, %v415, 0
        %431 = vmatprep.subr.mxu0 0.0
        %432 = vmatpush1.msra.mxu0 %v417
        %433 = vmatprep.subr.mxu0 0.0
        %434 = vmatpush1.msra.mxu0 %v418
        %435 = vmatprep.subr.mxu0 0.0
        %436 = vmatpush1.msra.mxu0 %v419
        %437 = vmatprep.subr.mxu0 0.0
        %438 = vmatpush1.msra.mxu0 %v420
        %439 = vmatprep.subr.mxu0 0.0
        %440 = vmatpush1.msra.mxu0 %v421
        %441 = vmatprep.subr.mxu0 0.0
        %442 = vmatpush1.msra.mxu0 %v422
        %443 = vmatprep.subr.mxu0 0.0
        %444 = vmatpush1.msra.mxu0 %v423
        %445 = vmatprep.subr.mxu0 0.0
        %446 = vmatpush1.msra.mxu0 %v424
        %447 = vmatprep.subr.mxu0 0.0
        %448 = vmatpush1.msra.mxu0 0.0
        %449 = vmatprep.subr.mxu0 0.0
        %450 = vmatpush1.msra.mxu0 0.0
        %451 = vmatprep.subr.mxu0 0.0
        %452 = vmatpush1.msra.mxu0 0.0
        %453 = vmatprep.subr.mxu0 0.0
        %454 = vmatpush1.msra.mxu0 0.0
        %455 = vmatprep.subr.mxu0 0.0
        %456 = vmatpush1.msra.mxu0 0.0
        %457 = vmatprep.subr.mxu0 0.0
        %458 = vmatpush1.msra.mxu0 0.0
        %459 = vmatprep.subr.mxu0 0.0
        %460 = vmatpush1.msra.mxu0 0.0
        %461 = vmatprep.subr.mxu0 0.0
        %462 = vmatpush1.msra.mxu0 0.0
        %463 = vmatprep.subr.mxu0 0.0
        %464 = vmatpush1.msra.mxu0 0.0
        %465 = vmatprep.subr.mxu0 0.0
        %466 = vmatpush1.msra.mxu0 0.0
        %467 = vmatprep.subr.mxu0 0.0
        %468 = vmatpush1.msra.mxu0 0.0
        %469 = vmatprep.subr.mxu0 0.0
        %470 = vmatpush1.msra.mxu0 0.0
        %471 = vmatprep.subr.mxu0 0.0
        %472 = vmatpush1.msra.mxu0 0.0
        %473 = vmatprep.subr.mxu0 0.0
        %474 = vmatpush1.msra.mxu0 0.0
        %475 = vmatprep.subr.mxu0 0.0
        %476 = vmatpush1.msra.mxu0 0.0
        %477 = vmatprep.subr.mxu0 0.0
        %478 = vmatpush1.msra.mxu0 0.0
        %479 = vmatprep.subr.mxu0 0.0
        %480 = vmatpush1.msra.mxu0 0.0
        %481 = vmatprep.subr.mxu0 0.0
        %482 = vmatpush1.msra.mxu0 0.0
        %483 = vmatprep.subr.mxu0 0.0
        %484 = vmatpush1.msra.mxu0 0.0
        %485 = vmatprep.subr.mxu0 0.0
        %486 = vmatpush1.msra.mxu0 0.0
        %487 = vmatprep.subr.mxu0 0.0
        %488 = vmatpush1.msra.mxu0 0.0
        %489 = vmatprep.subr.mxu0 0.0
        %490 = vmatpush1.msra.mxu0 0.0
        %491 = vmatprep.subr.mxu0 0.0
        %492 = vmatpush1.msra.mxu0 0.0
        %493 = vmatprep.subr.mxu0 0.0
        %494 = vmatpush1.msra.mxu0 0.0
        %495 = vmatprep.mubr.f32.mxu0 0.0
        %496 = vmatmul.mubr.f32.gmra.mrb[0].mxu0 %v426
        %v497 = vpop.f32.mrb[0].mxu0
        %v498 = vadd.f32 0.0, %v497
        %v499 = vpop.f32.mrb[0].mxu0
        %500 = vmatprep.mubr.f32.mxu0 0.0
        %501 = vmatmul.mubr.f32.gmra.mrb[0].mxu0 %v429
        %v502 = vpop.f32.mrb[0].mxu0
        %v503 = vadd.f32 0.0, %v502
        %v504 = vpop.f32.mrb[0].mxu0
        %505 = vdwg.mxu0
        %v506 = vadd.f32 %v406, %v498
        %v507 = vadd.f32 %v411, %v503
        %v508 = vld [vmem:[%s2] sm:$0x1]
        %v510 = vlaneseq
        %v511 = vshrl.u32 %v510, 7
        %v512 = vsub.s32 0, %v511
        %v513 = vrot.slane %v508, %v512
        %v515 = vadd.f32 %v506, %v513
        %v516 = vadd.f32 %v507, %v513
        %v517 = vtanh.pop %v515
        %v518 = vtanh.pop %v516
        %519 = vst [vmem:[#allocation3] sm:$0x1] 0.0
        %520 = vst [vmem:[#allocation3 + $0x11] sm:$0x1] 0.0
        %521 = vst [vmem:[#allocation3 + $0x1] sm:$0xff] %v517
        %522 = vst [vmem:[#allocation3 + $0x9] sm:$0xff] %v518
        %v523 = vld [vmem:[#allocation3] sm:$0xff]
        %v524 = vld [vmem:[#allocation3 + $0x8] sm:$0xff]
        %v525 = vld [vmem:[%s3] sm:$0xff]
        %v526 = vld [vmem:[%s3 + $0x8] sm:$0xff]
        %v527 = vld [vmem:[%s3 + $0x10] sm:$0xff]
        %v528 = vld [vmem:[%s3 + $0x18] sm:$0xff]
        %v529 = vld [vmem:[%s3 + $0x20] sm:$0xff]
        %v530 = vld [vmem:[%s3 + $0x28] sm:$0xff]
        %v531 = vld [vmem:[%s3 + $0x30] sm:$0xff]
        %v532 = vld [vmem:[%s3 + $0x38] sm:$0xff]
        %v533 = vld [vmem:[%s3 + $0x40] sm:$0xff]
        %v534 = vld [vmem:[%s3 + $0x48] sm:$0xff]
        %v535 = vld [vmem:[%s3 + $0x50] sm:$0xff]
        %v536 = vld [vmem:[%s3 + $0x58] sm:$0xff]
        %v537 = vld [vmem:[%s3 + $0x60] sm:$0xff]
        %v538 = vld [vmem:[%s3 + $0x68] sm:$0xff]
        %v539 = vld [vmem:[%s3 + $0x70] sm:$0xff]
        %v540 = vld [vmem:[%s3 + $0x78] sm:$0xff]
        %v541 = vld [vmem:[#allocation3 + $0x1] sm:$0xff]
        %v542 = vld [vmem:[#allocation3 + $0x9] sm:$0xff]
        %s543 = scalar_lea.vmem %s3, 128
        %v544 = vld [vmem:[%s543] sm:$0xff]
        %v545 = vld [vmem:[%s543 + $0x8] sm:$0xff]
        %v546 = vld [vmem:[%s543 + $0x10] sm:$0xff]
        %v547 = vld [vmem:[%s543 + $0x18] sm:$0xff]
        %v548 = vld [vmem:[%s543 + $0x20] sm:$0xff]
        %v549 = vld [vmem:[%s543 + $0x28] sm:$0xff]
        %v550 = vld [vmem:[%s543 + $0x30] sm:$0xff]
        %v551 = vld [vmem:[%s543 + $0x38] sm:$0xff]
        %v552 = vld [vmem:[%s543 + $0x40] sm:$0xff]
        %v553 = vld [vmem:[%s543 + $0x48] sm:$0xff]
        %v554 = vld [vmem:[%s543 + $0x50] sm:$0xff]
        %v555 = vld [vmem:[%s543 + $0x58] sm:$0xff]
        %v556 = vld [vmem:[%s543 + $0x60] sm:$0xff]
        %v557 = vld [vmem:[%s543 + $0x68] sm:$0xff]
        %v558 = vld [vmem:[%s543 + $0x70] sm:$0xff]
        %v559 = vld [vmem:[%s543 + $0x78] sm:$0xff]
        %560 = vmatprep.subr.mxu0 0.0
        %561 = vmatpush1.msra.mxu0 %v544
        %562 = vmatprep.subr.mxu0 0.0
        %563 = vmatpush1.msra.mxu0 %v545
        %564 = vmatprep.subr.mxu0 0.0
        %565 = vmatpush1.msra.mxu0 %v546
        %566 = vmatprep.subr.mxu0 0.0
        %567 = vmatpush1.msra.mxu0 %v547
        %568 = vmatprep.subr.mxu0 0.0
        %569 = vmatpush1.msra.mxu0 %v548
        %570 = vmatprep.subr.mxu0 0.0
        %571 = vmatpush1.msra.mxu0 %v549
        %572 = vmatprep.subr.mxu0 0.0
        %573 = vmatpush1.msra.mxu0 %v550
        %574 = vmatprep.subr.mxu0 0.0
        %575 = vmatpush1.msra.mxu0 %v551
        %576 = vmatprep.subr.mxu0 0.0
        %577 = vmatpush1.msra.mxu0 %v552
        %578 = vmatprep.subr.mxu0 0.0
        %579 = vmatpush1.msra.mxu0 %v553
        %580 = vmatprep.subr.mxu0 0.0
        %581 = vmatpush1.msra.mxu0 %v554
        %582 = vmatprep.subr.mxu0 0.0
        %583 = vmatpush1.msra.mxu0 %v555
        %584 = vmatprep.subr.mxu0 0.0
        %585 = vmatpush1.msra.mxu0 %v556
        %586 = vmatprep.subr.mxu0 0.0
        %587 = vmatpush1.msra.mxu0 %v557
        %588 = vmatprep.subr.mxu0 0.0
        %589 = vmatpush1.msra.mxu0 %v558
        %590 = vmatprep.subr.mxu0 0.0
        %591 = vmatpush1.msra.mxu0 %v559
        %592 = vmatprep.subr.mxu0 0.0
        %593 = vmatpush1.msra.mxu0 0.0
        %594 = vmatprep.subr.mxu0 0.0
        %595 = vmatpush1.msra.mxu0 0.0
        %596 = vmatprep.subr.mxu0 0.0
        %597 = vmatpush1.msra.mxu0 0.0
        %598 = vmatprep.subr.mxu0 0.0
        %599 = vmatpush1.msra.mxu0 0.0
        %600 = vmatprep.subr.mxu0 0.0
        %601 = vmatpush1.msra.mxu0 0.0
        %602 = vmatprep.subr.mxu0 0.0
        %603 = vmatpush1.msra.mxu0 0.0
        %604 = vmatprep.subr.mxu0 0.0
        %605 = vmatpush1.msra.mxu0 0.0
        %606 = vmatprep.subr.mxu0 0.0
        %607 = vmatpush1.msra.mxu0 0.0
        %608 = vmatprep.subr.mxu0 0.0
        %609 = vmatpush1.msra.mxu0 0.0
        %610 = vmatprep.subr.mxu0 0.0
        %611 = vmatpush1.msra.mxu0 0.0
        %612 = vmatprep.subr.mxu0 0.0
        %613 = vmatpush1.msra.mxu0 0.0
        %614 = vmatprep.subr.mxu0 0.0
        %615 = vmatpush1.msra.mxu0 0.0
        %616 = vmatprep.subr.mxu0 0.0
        %617 = vmatpush1.msra.mxu0 0.0
        %618 = vmatprep.subr.mxu0 0.0
        %619 = vmatpush1.msra.mxu0 0.0
        %620 = vmatprep.subr.mxu0 0.0
        %621 = vmatpush1.msra.mxu0 0.0
        %622 = vmatprep.subr.mxu0 0.0
        %623 = vmatpush1.msra.mxu0 0.0
        %624 = vmatprep.mubr.f32.mxu0 0.0
        %625 = vmatmul.mubr.f32.gmra.mrb[0].mxu0 %v541
        %v626 = vpop.f32.mrb[0].mxu0
        %v627 = vadd.f32 0.0, %v626
        %v628 = vpop.f32.mrb[0].mxu0
        %629 = vmatprep.mubr.f32.mxu0 0.0
        %630 = vmatmul.mubr.f32.gmra.mrb[0].mxu0 %v542
        %v631 = vpop.f32.mrb[0].mxu0
        %v632 = vadd.f32 0.0, %v631
        %v633 = vpop.f32.mrb[0].mxu0
        %634 = vdwg.mxu0
        %635 = vmatprep.subr.mxu0 0.0
        %636 = vmatpush1.msra.mxu0 %v525
        %637 = vmatprep.subr.mxu0 0.0
        %638 = vmatpush1.msra.mxu0 %v526
        %639 = vmatprep.subr.mxu0 0.0
        %640 = vmatpush1.msra.mxu0 %v527
        %641 = vmatprep.subr.mxu0 0.0
        %642 = vmatpush1.msra.mxu0 %v528
        %643 = vmatprep.subr.mxu0 0.0
        %644 = vmatpush1.msra.mxu0 %v529
        %645 = vmatprep.subr.mxu0 0.0
        %646 = vmatpush1.msra.mxu0 %v530
        %647 = vmatprep.subr.mxu0 0.0
        %648 = vmatpush1.msra.mxu0 %v531
        %649 = vmatprep.subr.mxu0 0.0
        %650 = vmatpush1.msra.mxu0 %v532
        %651 = vmatprep.subr.mxu0 0.0
        %652 = vmatpush1.msra.mxu0 %v533
        %653 = vmatprep.subr.mxu0 0.0
        %654 = vmatpush1.msra.mxu0 %v534
        %655 = vmatprep.subr.mxu0 0.0
        %656 = vmatpush1.msra.mxu0 %v535
        %657 = vmatprep.subr.mxu0 0.0
        %658 = vmatpush1.msra.mxu0 %v536
        %659 = vmatprep.subr.mxu0 0.0
        %660 = vmatpush1.msra.mxu0 %v537
        %661 = vmatprep.subr.mxu0 0.0
        %662 = vmatpush1.msra.mxu0 %v538
        %663 = vmatprep.subr.mxu0 0.0
        %664 = vmatpush1.msra.mxu0 %v539
        %665 = vmatprep.subr.mxu0 0.0
        %666 = vmatpush1.msra.mxu0 %v540
        %667 = vmatprep.subr.mxu0 0.0
        %668 = vmatpush1.msra.mxu0 0.0
        %669 = vmatprep.subr.mxu0 0.0
        %670 = vmatpush1.msra.mxu0 0.0
        %671 = vmatprep.subr.mxu0 0.0
        %672 = vmatpush1.msra.mxu0 0.0
        %673 = vmatprep.subr.mxu0 0.0
        %674 = vmatpush1.msra.mxu0 0.0
        %675 = vmatprep.subr.mxu0 0.0
        %676 = vmatpush1.msra.mxu0 0.0
        %677 = vmatprep.subr.mxu0 0.0
        %678 = vmatpush1.msra.mxu0 0.0
        %679 = vmatprep.subr.mxu0 0.0
        %680 = vmatpush1.msra.mxu0 0.0
        %681 = vmatprep.subr.mxu0 0.0
        %682 = vmatpush1.msra.mxu0 0.0
        %683 = vmatprep.subr.mxu0 0.0
        %684 = vmatpush1.msra.mxu0 0.0
        %685 = vmatprep.subr.mxu0 0.0
        %686 = vmatpush1.msra.mxu0 0.0
        %687 = vmatprep.subr.mxu0 0.0
        %688 = vmatpush1.msra.mxu0 0.0
        %689 = vmatprep.subr.mxu0 0.0
        %690 = vmatpush1.msra.mxu0 0.0
        %691 = vmatprep.subr.mxu0 0.0
        %692 = vmatpush1.msra.mxu0 0.0
        %693 = vmatprep.subr.mxu0 0.0
        %694 = vmatpush1.msra.mxu0 0.0
        %695 = vmatprep.subr.mxu0 0.0
        %696 = vmatpush1.msra.mxu0 0.0
        %697 = vmatprep.subr.mxu0 0.0
        %698 = vmatpush1.msra.mxu0 0.0
        %699 = vmatprep.mubr.f32.mxu0 0.0
        %700 = vmatmul.mubr.f32.gmra.mrb[0].mxu0 %v523
        %v701 = vpop.f32.mrb[0].mxu0
        %v702 = vadd.f32 %v627, %v701
        %v703 = vpop.f32.mrb[0].mxu0
        %704 = vmatprep.mubr.f32.mxu0 0.0
        %705 = vmatmul.mubr.f32.gmra.mrb[0].mxu0 %v524
        %v706 = vpop.f32.mrb[0].mxu0
        %v707 = vadd.f32 %v632, %v706
        %v708 = vpop.f32.mrb[0].mxu0
        %709 = vdwg.mxu0
        %v710 = vld [vmem:[#allocation3 + $0x2] sm:$0xff]
        %v711 = vld [vmem:[#allocation3 + $0xa] sm:$0xff]
        %s712 = scalar_lea.vmem %s3, 256
        %v713 = vld [vmem:[%s712] sm:$0xff]
        %v714 = vld [vmem:[%s712 + $0x8] sm:$0xff]
        %v715 = vld [vmem:[%s712 + $0x10] sm:$0xff]
        %v716 = vld [vmem:[%s712 + $0x18] sm:$0xff]
        %v717 = vld [vmem:[%s712 + $0x20] sm:$0xff]
        %v718 = vld [vmem:[%s712 + $0x28] sm:$0xff]
        %v719 = vld [vmem:[%s712 + $0x30] sm:$0xff]
        %v720 = vld [vmem:[%s712 + $0x38] sm:$0xff]
        %v721 = vld [vmem:[%s712 + $0x40] sm:$0xff]
        %v722 = vld [vmem:[%s712 + $0x48] sm:$0xff]
        %v723 = vld [vmem:[%s712 + $0x50] sm:$0xff]
        %v724 = vld [vmem:[%s712 + $0x58] sm:$0xff]
        %v725 = vld [vmem:[%s712 + $0x60] sm:$0xff]
        %v726 = vld [vmem:[%s712 + $0x68] sm:$0xff]
        %v727 = vld [vmem:[%s712 + $0x70] sm:$0xff]
        %v728 = vld [vmem:[%s712 + $0x78] sm:$0xff]
        %729 = vmatprep.subr.mxu0 0.0
        %730 = vmatpush1.msra.mxu0 %v713
        %731 = vmatprep.subr.mxu0 0.0
        %732 = vmatpush1.msra.mxu0 %v714
        %733 = vmatprep.subr.mxu0 0.0
        %734 = vmatpush1.msra.mxu0 %v715
        %735 = vmatprep.subr.mxu0 0.0
        %736 = vmatpush1.msra.mxu0 %v716
        %737 = vmatprep.subr.mxu0 0.0
        %738 = vmatpush1.msra.mxu0 %v717
        %739 = vmatprep.subr.mxu0 0.0
        %740 = vmatpush1.msra.mxu0 %v718
        %741 = vmatprep.subr.mxu0 0.0
        %742 = vmatpush1.msra.mxu0 %v719
        %743 = vmatprep.subr.mxu0 0.0
        %744 = vmatpush1.msra.mxu0 %v720
        %745 = vmatprep.subr.mxu0 0.0
        %746 = vmatpush1.msra.mxu0 %v721
        %747 = vmatprep.subr.mxu0 0.0
        %748 = vmatpush1.msra.mxu0 %v722
        %749 = vmatprep.subr.mxu0 0.0
        %750 = vmatpush1.msra.mxu0 %v723
        %751 = vmatprep.subr.mxu0 0.0
        %752 = vmatpush1.msra.mxu0 %v724
        %753 = vmatprep.subr.mxu0 0.0
        %754 = vmatpush1.msra.mxu0 %v725
        %755 = vmatprep.subr.mxu0 0.0
        %756 = vmatpush1.msra.mxu0 %v726
        %757 = vmatprep.subr.mxu0 0.0
        %758 = vmatpush1.msra.mxu0 %v727
        %759 = vmatprep.subr.mxu0 0.0
        %760 = vmatpush1.msra.mxu0 %v728
        %761 = vmatprep.subr.mxu0 0.0
        %762 = vmatpush1.msra.mxu0 0.0
        %763 = vmatprep.subr.mxu0 0.0
        %764 = vmatpush1.msra.mxu0 0.0
        %765 = vmatprep.subr.mxu0 0.0
        %766 = vmatpush1.msra.mxu0 0.0
        %767 = vmatprep.subr.mxu0 0.0
        %768 = vmatpush1.msra.mxu0 0.0
        %769 = vmatprep.subr.mxu0 0.0
        %770 = vmatpush1.msra.mxu0 0.0
        %771 = vmatprep.subr.mxu0 0.0
        %772 = vmatpush1.msra.mxu0 0.0
        %773 = vmatprep.subr.mxu0 0.0
        %774 = vmatpush1.msra.mxu0 0.0
        %775 = vmatprep.subr.mxu0 0.0
        %776 = vmatpush1.msra.mxu0 0.0
        %777 = vmatprep.subr.mxu0 0.0
        %778 = vmatpush1.msra.mxu0 0.0
        %779 = vmatprep.subr.mxu0 0.0
        %780 = vmatpush1.msra.mxu0 0.0
        %781 = vmatprep.subr.mxu0 0.0
        %782 = vmatpush1.msra.mxu0 0.0
        %783 = vmatprep.subr.mxu0 0.0
        %784 = vmatpush1.msra.mxu0 0.0
        %785 = vmatprep.subr.mxu0 0.0
        %786 = vmatpush1.msra.mxu0 0.0
        %787 = vmatprep.subr.mxu0 0.0
        %788 = vmatpush1.msra.mxu0 0.0
        %789 = vmatprep.subr.mxu0 0.0
        %790 = vmatpush1.msra.mxu0 0.0
        %791 = vmatprep.subr.mxu0 0.0
        %792 = vmatpush1.msra.mxu0 0.0
        %793 = vmatprep.mubr.f32.mxu0 0.0
        %794 = vmatmul.mubr.f32.gmra.mrb[0].mxu0 %v710
        %v795 = vpop.f32.mrb[0].mxu0
        %v796 = vadd.f32 0.0, %v795
        %v797 = vpop.f32.mrb[0].mxu0
        %798 = vmatprep.mubr.f32.mxu0 0.0
        %799 = vmatmul.mubr.f32.gmra.mrb[0].mxu0 %v711
        %v800 = vpop.f32.mrb[0].mxu0
        %v801 = vadd.f32 0.0, %v800
        %v802 = vpop.f32.mrb[0].mxu0
        %803 = vdwg.mxu0
        %v804 = vadd.f32 %v702, %v796
        %v805 = vadd.f32 %v707, %v801
        %v806 = vld [vmem:[%s4] sm:$0x1]
        %v808 = vlaneseq
        %v809 = vshrl.u32 %v808, 7
        %v810 = vsub.s32 0, %v809
        %v811 = vrot.slane %v806, %v810
        %v813 = vadd.f32 %v804, %v811
        %v814 = vadd.f32 %v805, %v811
        %v815 = vadd.f32 %v813, %v223
        %v816 = vadd.f32 %v814, %v224
        %v817 = vtanh.pop %v815
        %v818 = vtanh.pop %v816
        %819 = vst.msk [vmem:[%s217] sm:$0xff] %vm228, %v817
        %820 = vst.msk [vmem:[%s217 + $0x8] sm:$0xff] %vm228, %v818
        %s821 = sand.u32 %s137, 1
        %s822 = scalar_lea.sflag [#allocation5], %s821
        %s823 = sand.u32 %s137, 1
        %s824 = smul.addr %s823, 16
        %s825 = scalar_lea.vmem [#allocation4], %s824
        // Predicated region
        $region41: #{tpu_custom_call.1} parent=39 // pred_check
          %p826 = pneg %p147
        $region42: #{tpu_custom_call.1} parent=39 // pred_check_branch
          %828 = sbr.rel (%p826) target = $region44
        $region43: #{tpu_custom_call.1} parent=39 // pred_region
          %s830 = ssub.s32 256, 256
          %831 = vsyncadd %s822, %s830
          %s832 = smul.addr %s19, 2
          %s833 = smul.addr %s832, 128
          %s834 = scalar_lea.hbm %s5, %s833
          %s835 = sshll.u32 %s825, 4
          %s836 = int_to_ptr.vmem [resolvable:$true] %s835
          %841 = dma.vmem_to_hbm [thread:$0]  %s836, 256, %s834, %s822, 128, 128, 8
        $region44: #{tpu_custom_call.1} parent=39 // pred_fallthru
          _
      $region40: #{tpu_custom_call.1} parent=5 // pred_fallthru
        _
      %p842 = scmp.le.s32.totalorder 2, %s14
      // Predicated region
      $region45: #{tpu_custom_call.1} parent=5 // pred_check
        %p843 = pneg %p842
      $region46: #{tpu_custom_call.1} parent=5 // pred_check_branch
        %845 = sbr.rel (%p843) target = $region48
      $region47: #{tpu_custom_call.1} parent=5 // pred_region
        %s846 = ssub.s32 %s14, 2
        // Predicated region
        $region49: #{tpu_custom_call.1} parent=47 // pred_check
          %p847 = pneg %p153
        $region50: #{tpu_custom_call.1} parent=47 // pred_check_branch
          %849 = sbr.rel (%p847) target = $region52
        $region51: #{tpu_custom_call.1} parent=47 // pred_region
          %s850 = sand.u32 %s138, 1
          %s851 = scalar_lea.sflag [#allocation5], %s850
          %s852 = sand.u32 %s138, 1
          %s853 = smul.addr %s852, 16
          %s854 = scalar_lea.vmem [#allocation4], %s853
          %855 = dma.done %s851, 256
        $region52: #{tpu_custom_call.1} parent=47 // pred_fallthru
          _
      $region48: #{tpu_custom_call.1} parent=5 // pred_fallthru
        _
    $region6: #{tpu_custom_call.1} parent=1 // loop_footer
      %s18 = sadd.s32 1, %s14
    $region7: #{tpu_custom_call.1} parent=1 // loop_footer_branch
      %13 = sbr.rel target = $region3
    $region8: #{tpu_custom_call.1} parent=1 // loop_exit
      _
    %856 = vsyncpa [#allocation5], 1
    %s857 = scalar_lea.sflag [#allocation5], 1
    %858 = vsyncpa %s857, 1

</llo_original>
